<compile_context>
chip_gen: v7x
topology: tpu7x:2x2x1
jax: 0.10.0
libtpu: 0.0.40
codegen_flags: <defaults>
</compile_context>

<pallas_src>
import math
import functools

import jax
import jax.numpy as jnp
from jax.experimental import pallas as pl
from jax.experimental.pallas import tpu as pltpu


def make_pos_embedding(emb_size: int, maxlen: int = 5000) -> jnp.ndarray:
    """Deterministic sin/cos table, identical to the PyTorch __init__."""
    den = jnp.exp(-jnp.arange(0, emb_size, 2, dtype=jnp.float32)
                  * math.log(10000.0) / emb_size)                 # (emb_size//2,)
    pos = jnp.arange(0, maxlen, dtype=jnp.float32).reshape(maxlen, 1)
    pe = jnp.zeros((maxlen, emb_size), dtype=jnp.float32)
    pe = pe.at[:, 0::2].set(jnp.sin(pos * den))
    pe = pe.at[:, 1::2].set(jnp.cos(pos * den))
    return pe[:, None, :]                                          # (maxlen, 1, emb_size)


# ----------------------------- kernels --------------------------------------

def _add_pe_kernel(x_ref, pos_ref, o_ref):
    # x_ref / pos_ref / o_ref: (ts, B*E) VMEM tiles (pos already tiled over batch).
    o_ref[...] = (x_ref[...] + pos_ref[...]).astype(o_ref.dtype)


def _add_pe_dropout_kernel(x_ref, pos_ref, bits_ref, o_ref, *, threshold, scale):
    # Training-mode dropout: keep with prob (1-p), scale kept values by 1/(1-p).
    # Integer threshold on raw uint32 bits: P(bits >= p*2^32) = 1 - p.
    y = x_ref[...] + pos_ref[...]
    keep = bits_ref[...] >= jnp.uint32(threshold)
    o_ref[...] = jnp.where(keep, y * scale, 0.0).astype(o_ref.dtype)


# ----------------------------- wrapper ---------------------------------------

def _choose_seq_tile(S, row_bytes, target_block_bytes):
    """Pick a seq tile so a block is ~target_block_bytes; multiple of 8 or full S."""
    ts = max(1, target_block_bytes // max(int(row_bytes), 1))
    if ts >= S:
        return S
    return min(S, max(8, (ts // 8) * 8))


def positional_encoding_forward(token_embedding, pos_embedding, *,
                                dropout_p: float, training: bool,
                                rng_key=None, target_block_bytes: int = 2 << 20):
    """Equivalent of PositionalEncoding.forward(token_embedding)."""
    S, B, E = token_embedding.shape
    D = B * E
    dtype = token_embedding.dtype
    itemsize = jnp.dtype(dtype).itemsize
    p = float(dropout_p)
    use_dropout = bool(training) and p > 0.0

    # Degenerate PyTorch case: nn.Dropout(p=1.0) zeroes everything in training.
    if use_dropout and p >= 1.0:
        return jnp.zeros_like(token_embedding)

    # Lane-dense layout: collapse (B, E) -> D.  The positional table is tiled
    # once (cheap, done in plain JAX) so pos2[s, b*E + e] == pos[s, e].
    x2 = token_embedding.reshape(S, D)
    pos2 = jnp.tile(pos_embedding[:S, 0, :].astype(dtype), (1, B))   # (S, D)

    extra_bytes = 4 if use_dropout else 0                            # uint32 bits input
    ts = _choose_seq_tile(S, D * (itemsize + extra_bytes), target_block_bytes)
    grid = (pl.cdiv(S, ts),)
    block = pl.BlockSpec((ts, D), lambda i: (i, 0))

    # Explicit VMEM budget: double-buffered x/pos/out (+ bits) with headroom,
    # kept well under v7x's 64 MiB.
    block_bytes = ts * D * itemsize
    vmem_needed = 2 * (3 * block_bytes + (ts * D * 4 if use_dropout else 0))
    vmem_limit = int(min(vmem_needed + (8 << 20), 96 << 20))

    params = pltpu.CompilerParams(
        dimension_semantics=("parallel",),        # tiles independent -> both TCs on v7x
        vmem_limit_bytes=vmem_limit,
    )

    if not use_dropout:
        out2 = pl.pallas_call(
            _add_pe_kernel,
            out_shape=jax.ShapeDtypeStruct((S, D), dtype),
            grid=grid,
            in_specs=[block, block],
            out_specs=block,
            compiler_params=params,
        )(x2, pos2)
    else:
        if rng_key is None:
            rng_key = jax.random.PRNGKey(0)
        bits = jax.random.bits(rng_key, (S, D), dtype=jnp.uint32)
        threshold = min(int(round(p * 4294967296.0)), 4294967295)
        scale = 1.0 / (1.0 - p)
        kernel = functools.partial(_add_pe_dropout_kernel,
                                   threshold=threshold, scale=scale)
        out2 = pl.pallas_call(
            kernel,
            out_shape=jax.ShapeDtypeStruct((S, D), dtype),
            grid=grid,
            in_specs=[block, block, block],
            out_specs=block,
            compiler_params=params,
        )(x2, pos2, bits)

    return out2.reshape(S, B, E)


# ----------------------------- demo / checks ---------------------------------

if __name__ == "__main__":
    # Small shapes consistent with the module's forward: (seq, batch, emb)
    SEQ, BATCH, EMB = 8, 2, 32
    MAXLEN = 64
    DROPOUT_P = 0.1

    key = jax.random.PRNGKey(0)
    k_x, k_drop = jax.random.split(key)
    token_embedding = jax.random.normal(k_x, (SEQ, BATCH, EMB), dtype=jnp.float32)
    pos_embedding = make_pos_embedding(EMB, MAXLEN)

    ref = token_embedding + pos_embedding[:SEQ]                      # pure-JAX reference

    # Eval mode: dropout is identity -> exact match.
    out_eval = positional_encoding_forward(token_embedding, pos_embedding,
                                           dropout_p=DROPOUT_P, training=False)
    out_eval = jax.block_until_ready(out_eval)
    assert out_eval.shape == (SEQ, BATCH, EMB)
    assert jnp.allclose(out_eval, ref, atol=1e-6), "eval-mode output mismatch"

    # Training mode: every element is either dropped (0) or kept and scaled by 1/(1-p).
    out_train = positional_encoding_forward(token_embedding, pos_embedding,
                                            dropout_p=DROPOUT_P, training=True,
                                            rng_key=k_drop)
    out_train = jax.block_until_ready(out_train)
    assert out_train.shape == (SEQ, BATCH, EMB)
    scaled = ref / (1.0 - DROPOUT_P)
    ok = (jnp.isclose(out_train, 0.0, atol=1e-6)
          | jnp.isclose(out_train, scaled, rtol=1e-5, atol=1e-5))
    assert bool(jnp.all(ok)), "training-mode output is neither 0 nor ref/(1-p)"

    print("KERNEL_OK")
</pallas_src>

<mosaic_0001>
module attributes {stable_mosaic.version = 11 : i64} {
  func.func @_add_pe_kernel(%arg0: i32, %arg1: memref<8x64xf32, #tpu.memory_space<vmem>>, %arg2: memref<8x64xf32, #tpu.memory_space<vmem>>, %arg3: memref<8x64xf32, #tpu.memory_space<vmem>>) attributes {dimension_semantics = [#tpu.dimension_semantics<parallel>], iteration_bounds = array<i64: 1>, scalar_prefetch = 0 : i64, scratch_operands = 0 : i64, tpu.core_type = #tpu.core_type<tc>, window_params = [{transform_indices = @transform_0, window_bounds = array<i64: 8, 64>}, {transform_indices = @transform_1, window_bounds = array<i64: 8, 64>}, {transform_indices = @transform_2, window_bounds = array<i64: 8, 64>}]} {
    %c0 = arith.constant 0 : index
    %c0_0 = arith.constant 0 : index
    %0 = vector.load %arg1[%c0, %c0_0] : memref<8x64xf32, #tpu.memory_space<vmem>>, vector<8x64xf32>
    %c0_1 = arith.constant 0 : index
    %c0_2 = arith.constant 0 : index
    %1 = vector.load %arg2[%c0_1, %c0_2] : memref<8x64xf32, #tpu.memory_space<vmem>>, vector<8x64xf32>
    %2 = arith.addf %0, %1 : vector<8x64xf32>
    %c0_3 = arith.constant 0 : index
    %c0_4 = arith.constant 0 : index
    %3 = vector.load %arg3[%c0_3, %c0_4] : memref<8x64xf32, #tpu.memory_space<vmem>>, vector<8x64xf32>
    tpu.vector_store %arg3[%c0_3, %c0_4], %2 {strides = array<i32>} : memref<8x64xf32, #tpu.memory_space<vmem>>, vector<8x64xf32>,
    return
  }
  func.func @transform_0(%arg0: i32) -> (i32, i32) {
    %c0_i32 = arith.constant 0 : i32
    %c0_i32_0 = arith.constant 0 : i32
    return %arg0, %c0_i32 : i32, i32
  }
  func.func @transform_1(%arg0: i32) -> (i32, i32) {
    %c0_i32 = arith.constant 0 : i32
    %c0_i32_0 = arith.constant 0 : i32
    return %arg0, %c0_i32 : i32, i32
  }
  func.func @transform_2(%arg0: i32) -> (i32, i32) {
    %c0_i32 = arith.constant 0 : i32
    %c0_i32_0 = arith.constant 0 : i32
    return %arg0, %c0_i32 : i32, i32
  }
}

</mosaic_0001>

<llo_original>
// kernel: tpu_custom_call.1
$region0: #{tpu_custom_call.1}
  #allocation0 [shape = 'u32[]', space=smem, size = 0x4, offset = 0x4, fixed_abs, tag = 'smem constant byte address 0x4 - core index']
  #allocation1 [shape = 'u32[144,128]{1,0:T(1,128)}', space=vmem, size = 0x12000, scoped, tag = 'internal scratch']
  %s0 = inlined_call_operand.hbm [shape: f32[8,64], index: 0, kind: input, shape index: {}]
  %s1 = inlined_call_operand.hbm [shape: f32[8,64], index: 1, kind: input, shape index: {}]
  %s2 = inlined_call_operand.hbm [shape: f32[8,64], index: 2, kind: output, shape index: {}]
  %s3 = sld [smem:[#allocation0]]
  $region26: #{tpu_custom_call.1} parent=0
    _
  %s5 = ssub.s32 1, %s3
  %s6 = scalar_select 0, %s5, %s3
  $region1: #{tpu_custom_call.1} parent=0
    #allocation2 [shape = 'u8[4096]{0}', space=vmem, size = 0x1000, scoped, tag = 'input window, operand 0, single buffered']
    #allocation3 [shape = 's32[1]{0}', space=sflag, size = 0x4, scoped, tag = 'scoped memory for tpu_custom_call.1']
    #allocation4 [shape = 's32[1]{0}', space=sflag, size = 0x4, scoped, tag = 'scoped memory for tpu_custom_call.1']
    #allocation5 [shape = 'u8[4096]{0}', space=vmem, size = 0x1000, scoped, tag = 'input window, operand 1, single buffered']
    #allocation6 [shape = 's32[1]{0}', space=sflag, size = 0x4, scoped, tag = 'scoped memory for tpu_custom_call.1']
    #allocation7 [shape = 'u8[4096]{0}', space=vmem, size = 0x1000, scoped, tag = 'output window, operand 0, single buffered']
    %7 = vsyncpa [#allocation3], 0
    %8 = vsyncpa [#allocation6], 0
    %9 = vsyncpa [#allocation4], 0
    // Predicated region
    $region2: #{tpu_custom_call.1} parent=1 // pred_check
      _
    $region3: #{tpu_custom_call.1} parent=1 // pred_check_branch
      %11 = sbr.rel (0) target = $region5
    $region4: #{tpu_custom_call.1} parent=1 // pred_region
      %s13 = ssub.s32 128, 128
      %14 = vsyncadd [#allocation3], %s13
      %s16 = sshll.u32 [#allocation2], 4
      %s17 = int_to_ptr.vmem [resolvable:$true] %s16
      %19 = dma.hbm_to_vmem [thread:$0]  %s0, 128, %s17, [#allocation3]
    $region5: #{tpu_custom_call.1} parent=1 // pred_fallthru
      _
    // Predicated region
    $region6: #{tpu_custom_call.1} parent=1 // pred_check
      _
    $region7: #{tpu_custom_call.1} parent=1 // pred_check_branch
      %21 = sbr.rel (0) target = $region9
    $region8: #{tpu_custom_call.1} parent=1 // pred_region
      %s23 = ssub.s32 128, 128
      %24 = vsyncadd [#allocation6], %s23
      %s26 = sshll.u32 [#allocation5], 4
      %s27 = int_to_ptr.vmem [resolvable:$true] %s26
      %29 = dma.hbm_to_vmem [thread:$0]  %s1, 128, %s27, [#allocation6]
    $region9: #{tpu_custom_call.1} parent=1 // pred_fallthru
      _
    // Predicated region
    $region10: #{tpu_custom_call.1} parent=1 // pred_check
      _
    $region11: #{tpu_custom_call.1} parent=1 // pred_check_branch
      %31 = sbr.rel (0) target = $region13
    $region12: #{tpu_custom_call.1} parent=1 // pred_region
      %32 = dma.done [#allocation3], 128
    $region13: #{tpu_custom_call.1} parent=1 // pred_fallthru
      _
    // Predicated region
    $region14: #{tpu_custom_call.1} parent=1 // pred_check
      _
    $region15: #{tpu_custom_call.1} parent=1 // pred_check_branch
      %34 = sbr.rel (0) target = $region17
    $region16: #{tpu_custom_call.1} parent=1 // pred_region
      %35 = dma.done [#allocation6], 128
    $region17: #{tpu_custom_call.1} parent=1 // pred_fallthru
      _
    %v36 = vld [vmem:[#allocation2] sm:$0xff]
    %v37 = vld [vmem:[#allocation5] sm:$0xff]
    %v38 = vadd.f32 %v36, %v37
    %vm39 = vcmask 523264
    %40 = vst.msk [vmem:[#allocation7] sm:$0xff] %vm39, %v38
    // Predicated region
    $region18: #{tpu_custom_call.1} parent=1 // pred_check
      _
    $region19: #{tpu_custom_call.1} parent=1 // pred_check_branch
      %42 = sbr.rel (0) target = $region21
    $region20: #{tpu_custom_call.1} parent=1 // pred_region
      %s44 = ssub.s32 128, 128
      %45 = vsyncadd [#allocation4], %s44
      %s47 = sshll.u32 [#allocation7], 4
      %s48 = int_to_ptr.vmem [resolvable:$true] %s47
      %50 = dma.vmem_to_hbm [thread:$0]  %s48, 128, %s2, [#allocation4]
    $region21: #{tpu_custom_call.1} parent=1 // pred_fallthru
      _
    // Predicated region
    $region22: #{tpu_custom_call.1} parent=1 // pred_check
      _
    $region23: #{tpu_custom_call.1} parent=1 // pred_check_branch
      %52 = sbr.rel (0) target = $region25
    $region24: #{tpu_custom_call.1} parent=1 // pred_region
      %53 = dma.done [#allocation4], 128
    $region25: #{tpu_custom_call.1} parent=1 // pred_fallthru
      _
    %54 = vsyncpa [#allocation3], 1
    %55 = vsyncpa [#allocation6], 1
    %56 = vsyncpa [#allocation4], 1

</llo_original>
